<compile_context>
chip_gen: v5e
topology: v5e:2x2
jax: 0.10.0
libtpu: 0.0.40
codegen_flags: <defaults>
</compile_context>

<pallas_src>
import numpy as np
import jax
import jax.numpy as jnp
from jax.experimental import pallas as pl
from jax.experimental.pallas import tpu as pltpu


def _make_kernel(Cin, Cout, T, s, Qh, Qw):
    M = Qh * Qw        # flattened per-phase spatial extent (lane axis)
    P = s * s          # number of sub-pixel phases

    def kernel(xp_ref, wt_ref, bt_ref, o_ref, pt_ref):
        # xp_ref: (1, Cin, Hp, Wp)      compact input padded by (T-1), channel-first
        # wt_ref: (2*P*Cout, T*T*Cin)   fused [conv | gate] x phase weights
        # bt_ref: (2*P*Cout, 1)         fused biases
        # o_ref : (1, P*Cout, Qh*Qw)    gated output, phases separated, lane-dense
        # pt_ref: (T*T*Cin, Qh*Qw)      VMEM scratch: transposed im2col patch
        xp = xp_ref[0]                                       # (Cin, Hp, Wp)

        # Build the transposed im2col patch once; it is shared by both branches
        # and all s*s phases (only the weight differs per phase/branch).
        for th in range(T):
            for tw in range(T):
                tap = th * T + tw
                pt_ref[tap * Cin:(tap + 1) * Cin, :] = (
                    xp[:, th:th + Qh, tw:tw + Qw].reshape(Cin, M))

        # Single fused GEMM on the MXU (default precision = single bf16 pass;
        # TODO(synk): pass precision=jax.lax.Precision.HIGH if <1e-2 abs error
        # is required).
        r = jnp.dot(wt_ref[...], pt_ref[...],
                    preferred_element_type=jnp.float32) + bt_ref[...]
        half = P * Cout
        o_ref[0] = r[:half] * jax.nn.sigmoid(r[half:])       # (P*Cout, M)

    return kernel


def gate_conv_transpose(x_nchw, w1, b1, w2, b2, stride):
    """Gate_Conv forward (de_flag=1).
    x_nchw: (N, Cin, H, W); w*: PyTorch ConvTranspose2d layout (Cin, Cout, k, k);
    b*: (Cout,). Returns NCHW output (N, Cout, (H-1)*stride+k, (W-1)*stride+k)."""
    N, Cin, H, W = x_nchw.shape
    _, Cout, k, _ = w1.shape
    s = stride
    T = -(-k // s)                       # taps per phase = ceil(k / s)
    Ho = (H - 1) * s + k
    Wo = (W - 1) * s + k
    Qh = H + T - 1                       # per-phase output extent (full corr.)
    Qw = W + T - 1
    M = Qh * Qw
    P = s * s

    # ---- wrapper glue (small, single pass each) ----------------------------
    # Only a (T-1)-pad of the compact input; no zero-insertion, no layout
    # transpose (kernel consumes NCHW directly).
    xpad = jnp.pad(x_nchw.astype(jnp.float32),
                   ((0, 0), (0, 0), (T - 1, T - 1), (T - 1, T - 1)))
    Hp, Wp = H + 2 * (T - 1), W + 2 * (T - 1)

    kpad = s * T - k

    def prep_w(w):
        w = w.astype(jnp.float32)
        if kpad:
            w = jnp.pad(w, ((0, 0), (0, 0), (0, kpad), (0, kpad)))
        # split kh -> (th, ph), kw -> (tw, pw); flip the tap axes so the kernel
        # is a plain stride-1 correlation per phase.
        w = w.reshape(Cin, Cout, T, s, T, s)[:, :, ::-1, :, ::-1, :]
        # -> rows ordered (ph, pw, co), cols ordered (th, tw, ci)
        w = jnp.transpose(w, (3, 5, 1, 2, 4, 0))
        return w.reshape(P * Cout, T * T * Cin)

    wt = jnp.concatenate([prep_w(w1), prep_w(w2)], axis=0)   # (2*P*Cout, K)
    bt = jnp.concatenate([jnp.tile(b1.astype(jnp.float32), P),
                          jnp.tile(b2.astype(jnp.float32), P)],
                         axis=0).reshape(2 * P * Cout, 1)

    kernel = _make_kernel(Cin, Cout, T, s, Qh, Qw)

    out_k = pl.pallas_call(
        kernel,
        out_shape=jax.ShapeDtypeStruct((N, P * Cout, M), jnp.float32),
        grid_spec=pltpu.PrefetchScalarGridSpec(
            num_scalar_prefetch=0,
            grid=(N,),
            in_specs=[
                pl.BlockSpec((1, Cin, Hp, Wp), lambda n: (n, 0, 0, 0)),
                pl.BlockSpec((2 * P * Cout, T * T * Cin), lambda n: (0, 0)),
                pl.BlockSpec((2 * P * Cout, 1), lambda n: (0, 0)),
            ],
            out_specs=pl.BlockSpec((1, P * Cout, M), lambda n: (n, 0, 0)),
            scratch_shapes=[pltpu.VMEM((T * T * Cin, M), jnp.float32)],
        ),
        # TODO(synk): for large H, W add a second parallel grid axis over row
        # tiles (with a T-1 halo) and set vmem_limit_bytes — relevant for v7x's
        # 64 MiB VMEM / dual TensorCores and v5e's 16 MiB scoped-VMEM default.
        compiler_params=pltpu.CompilerParams(
            dimension_semantics=("parallel",)),
    )(xpad, wt, bt)

    # Interleave the s*s phase grids back into the dense NCHW output
    # (one output-sized pass; replaces the previous NHWC->NCHW transpose).
    out = out_k.reshape(N, s, s, Cout, Qh, Qw)
    out = jnp.transpose(out, (0, 3, 4, 1, 5, 2))              # (N,Cout,Qh,s,Qw,s)
    out = out.reshape(N, Cout, Qh * s, Qw * s)[:, :, :Ho, :Wo]
    return out


def _ref_conv_transpose2d(x, w, b, stride):
    """Independent numpy reference matching torch.nn.ConvTranspose2d (padding=0)."""
    N, Cin, H, W = x.shape
    _, Cout, k, _ = w.shape
    Ho = (H - 1) * stride + k
    Wo = (W - 1) * stride + k
    out = np.zeros((N, Cout, Ho, Wo), np.float64)
    for ih in range(H):
        for iw in range(W):
            out[:, :, ih * stride:ih * stride + k, iw * stride:iw * stride + k] += \
                np.einsum('nc,cokl->nokl', x[:, :, ih, iw], w)
    return (out + b[None, :, None, None]).astype(np.float32)


if __name__ == "__main__":
    # Gate_Conv(in_channels=4, out_channels=4, kernel_size=4, stride=2, de_flag=1)
    N, Cin, Cout, H, W = 2, 4, 4, 16, 16
    k, stride = 4, 2

    key = jax.random.PRNGKey(0)
    kx, kw1, kb1, kw2, kb2 = jax.random.split(key, 5)
    bound = 1.0 / np.sqrt(Cin * k * k)
    x = jax.random.normal(kx, (N, Cin, H, W), jnp.float32)
    w1 = jax.random.uniform(kw1, (Cin, Cout, k, k), jnp.float32, -bound, bound)
    b1 = jax.random.uniform(kb1, (Cout,), jnp.float32, -bound, bound)
    w2 = jax.random.uniform(kw2, (Cin, Cout, k, k), jnp.float32, -bound, bound)
    b2 = jax.random.uniform(kb2, (Cout,), jnp.float32, -bound, bound)

    fwd = jax.jit(gate_conv_transpose, static_argnums=5)
    out = jax.block_until_ready(fwd(x, w1, b1, w2, b2, stride))

    xn, w1n, b1n, w2n, b2n = map(np.asarray, (x, w1, b1, w2, b2))
    ref_main = _ref_conv_transpose2d(xn, w1n, b1n, stride)
    ref_gate = _ref_conv_transpose2d(xn, w2n, b2n, stride)
    ref = ref_main * (1.0 / (1.0 + np.exp(-ref_gate)))

    # Default (single-pass bf16) MXU precision: allow ~1e-2 absolute slack.
    np.testing.assert_allclose(np.asarray(out), ref, rtol=1e-2, atol=1e-2)
    print("KERNEL_OK")
</pallas_src>

<mosaic_0001>
module attributes {stable_mosaic.version = 11 : i64} {
  func.func @kernel(%arg0: i32, %arg1: memref<1x4x18x18xf32, #tpu.memory_space<vmem>>, %arg2: memref<32x16xf32, #tpu.memory_space<vmem>>, %arg3: memref<32x1xf32, #tpu.memory_space<vmem>>, %arg4: memref<1x16x289xf32, #tpu.memory_space<vmem>>, %arg5: memref<16x289xf32, #tpu.memory_space<vmem>>) attributes {dimension_semantics = [#tpu.dimension_semantics<parallel>], iteration_bounds = array<i64: 2>, scalar_prefetch = 0 : i64, scratch_operands = 1 : i64, tpu.core_type = #tpu.core_type<tc>, window_params = [{transform_indices = @transform_0, window_bounds = array<i64: 1, 4, 18, 18>}, {pipeline_mode = #tpu.pipeline_mode<synchronous>, transform_indices = @transform_1, window_bounds = array<i64: 32, 16>}, {pipeline_mode = #tpu.pipeline_mode<synchronous>, transform_indices = @transform_2, window_bounds = array<i64: 32, 1>}, {transform_indices = @transform_3, window_bounds = array<i64: 1, 16, 289>}]} {
    %c0 = arith.constant 0 : index
    %c0_0 = arith.constant 0 : index
    %c0_1 = arith.constant 0 : index
    %c0_2 = arith.constant 0 : index
    %0 = vector.load %arg1[%c0, %c0_0, %c0_1, %c0_2] : memref<1x4x18x18xf32, #tpu.memory_space<vmem>>, vector<1x4x18x18xf32>
    %1 = vector.shape_cast %0 : vector<1x4x18x18xf32> to vector<4x18x18xf32>
    %2 = vector.extract_strided_slice %1 {offsets = [0, 0, 0], sizes = [4, 17, 17], strides = [1, 1, 1]} : vector<4x18x18xf32> to vector<4x17x17xf32>
    %3 = vector.shape_cast %2 : vector<4x17x17xf32> to vector<4x289xf32>
    %c0_3 = arith.constant 0 : index
    %c0_4 = arith.constant 0 : index
    %4 = vector.load %arg5[%c0_3, %c0_4] : memref<16x289xf32, #tpu.memory_space<vmem>>, vector<4x289xf32>
    tpu.vector_store %arg5[%c0_3, %c0_4], %3 {strides = array<i32>} : memref<16x289xf32, #tpu.memory_space<vmem>>, vector<4x289xf32>,
    %5 = vector.extract_strided_slice %1 {offsets = [0, 0, 1], sizes = [4, 17, 17], strides = [1, 1, 1]} : vector<4x18x18xf32> to vector<4x17x17xf32>
    %6 = vector.shape_cast %5 : vector<4x17x17xf32> to vector<4x289xf32>
    %c4 = arith.constant 4 : index
    %c0_5 = arith.constant 0 : index
    %7 = vector.load %arg5[%c4, %c0_5] : memref<16x289xf32, #tpu.memory_space<vmem>>, vector<4x289xf32>
    tpu.vector_store %arg5[%c4, %c0_5], %6 {strides = array<i32>} : memref<16x289xf32, #tpu.memory_space<vmem>>, vector<4x289xf32>,
    %8 = vector.extract_strided_slice %1 {offsets = [0, 1, 0], sizes = [4, 17, 17], strides = [1, 1, 1]} : vector<4x18x18xf32> to vector<4x17x17xf32>
    %9 = vector.shape_cast %8 : vector<4x17x17xf32> to vector<4x289xf32>
    %c8 = arith.constant 8 : index
    %c0_6 = arith.constant 0 : index
    %10 = vector.load %arg5[%c8, %c0_6] : memref<16x289xf32, #tpu.memory_space<vmem>>, vector<4x289xf32>
    tpu.vector_store %arg5[%c8, %c0_6], %9 {strides = array<i32>} : memref<16x289xf32, #tpu.memory_space<vmem>>, vector<4x289xf32>,
    %11 = vector.extract_strided_slice %1 {offsets = [0, 1, 1], sizes = [4, 17, 17], strides = [1, 1, 1]} : vector<4x18x18xf32> to vector<4x17x17xf32>
    %12 = vector.shape_cast %11 : vector<4x17x17xf32> to vector<4x289xf32>
    %c12 = arith.constant 12 : index
    %c0_7 = arith.constant 0 : index
    %13 = vector.load %arg5[%c12, %c0_7] : memref<16x289xf32, #tpu.memory_space<vmem>>, vector<4x289xf32>
    tpu.vector_store %arg5[%c12, %c0_7], %12 {strides = array<i32>} : memref<16x289xf32, #tpu.memory_space<vmem>>, vector<4x289xf32>,
    %c0_8 = arith.constant 0 : index
    %c0_9 = arith.constant 0 : index
    %14 = vector.load %arg2[%c0_8, %c0_9] : memref<32x16xf32, #tpu.memory_space<vmem>>, vector<32x16xf32>
    %c0_10 = arith.constant 0 : index
    %c0_11 = arith.constant 0 : index
    %15 = vector.load %arg5[%c0_10, %c0_11] : memref<16x289xf32, #tpu.memory_space<vmem>>, vector<16x289xf32>
    %cst = arith.constant dense<0.000000e+00> : vector<32x289xf32>
    %16 = tpu.matmul %14, %15, %cst {dimension_numbers = #tpu.dot_dimension_numbers<[1], [0], [0], [1], [0, 0, 1, 1], [], []>} : vector<32x16xf32>, vector<16x289xf32>, vector<32x289xf32> -> vector<32x289xf32>
    %c0_12 = arith.constant 0 : index
    %c0_13 = arith.constant 0 : index
    %17 = vector.load %arg3[%c0_12, %c0_13] : memref<32x1xf32, #tpu.memory_space<vmem>>, vector<32x1xf32>
    %18 = vector.broadcast %17 : vector<32x1xf32> to vector<32x289xf32>
    %19 = arith.addf %16, %18 : vector<32x289xf32>
    %20 = vector.extract_strided_slice %19 {offsets = [0, 0], sizes = [16, 289], strides = [1, 1]} : vector<32x289xf32> to vector<16x289xf32>
    %21 = vector.extract_strided_slice %19 {offsets = [16, 0], sizes = [16, 289], strides = [1, 1]} : vector<32x289xf32> to vector<16x289xf32>
    %22 = arith.negf %21 : vector<16x289xf32>
    %23 = math.exp %22 : vector<16x289xf32>
    %cst_14 = arith.constant 1.000000e+00 : f32
    %24 = vector.broadcast %cst_14 : f32 to vector<16x289xf32>
    %25 = arith.addf %24, %23 : vector<16x289xf32>
    %26 = arith.divf %24, %25 : vector<16x289xf32>
    %27 = arith.mulf %20, %26 : vector<16x289xf32>
    %c0_15 = arith.constant 0 : index
    %c0_16 = arith.constant 0 : index
    %c0_17 = arith.constant 0 : index
    %28 = vector.load %arg4[%c0_15, %c0_16, %c0_17] : memref<1x16x289xf32, #tpu.memory_space<vmem>>, vector<1x16x289xf32>
    %29 = vector.shape_cast %28 : vector<1x16x289xf32> to vector<16x289xf32>
    %30 = vector.shape_cast %27 : vector<16x289xf32> to vector<1x16x289xf32>
    tpu.vector_store %arg4[%c0_15, %c0_16, %c0_17], %30 {strides = array<i32>} : memref<1x16x289xf32, #tpu.memory_space<vmem>>, vector<1x16x289xf32>,
    return
  }
  func.func @transform_0(%arg0: i32) -> (i32, i32, i32, i32) {
    %c0_i32 = arith.constant 0 : i32
    %c0_i32_0 = arith.constant 0 : i32
    %c0_i32_1 = arith.constant 0 : i32
    %c0_i32_2 = arith.constant 0 : i32
    return %arg0, %c0_i32, %c0_i32_0, %c0_i32_1 : i32, i32, i32, i32
  }
  func.func @transform_1(%arg0: i32) -> (i32, i32) {
    %c0_i32 = arith.constant 0 : i32
    %c0_i32_0 = arith.constant 0 : i32
    %c0_i32_1 = arith.constant 0 : i32
    return %c0_i32, %c0_i32_0 : i32, i32
  }
  func.func @transform_2(%arg0: i32) -> (i32, i32) {
    %c0_i32 = arith.constant 0 : i32
    %c0_i32_0 = arith.constant 0 : i32
    %c0_i32_1 = arith.constant 0 : i32
    return %c0_i32, %c0_i32_0 : i32, i32
  }
  func.func @transform_3(%arg0: i32) -> (i32, i32, i32) {
    %c0_i32 = arith.constant 0 : i32
    %c0_i32_0 = arith.constant 0 : i32
    %c0_i32_1 = arith.constant 0 : i32
    return %arg0, %c0_i32, %c0_i32_0 : i32, i32, i32
  }
}

</mosaic_0001>

<llo_original>
// kernel: tile.14
$region0: #{tile.14}
  %s0 = inlined_call_operand.vmem [shape: f32[4,4], index: 0, kind: input, shape index: {}]
  %s1 = inlined_call_operand.vmem [shape: f32[16], index: 1, kind: output, shape index: {}]
  $region1: #{tile.14} parent=0
    #allocation0 [shape = 'u8[4096]{0}', space=vmem, size = 0x1000, scoped, tag = 'scoped mem for output reshape']
    #allocation1 [shape = 'u8[4096]{0}', space=vmem, size = 0x1000, scoped, tag = 'scoped mem for input reshape']
    %s3 = ssub.s32 16, 1
    %v4 = vld [vmem:[%s0] sm:%s3]
    %5 = vst [vmem:[#allocation1] sm:%s3] %v4
    %v6 = vld [vmem:[#allocation1] sm:$0x1]
    %vm7 = vcmask 31744
    %8 = vst.msk [vmem:[#allocation0] sm:$0x1] %vm7, %v6
    %s9 = scalar_lea.vmem [#allocation1], 3
    %v10 = vld [vmem:[%s9] sm:$0x1]
    %11 = vrot.lane.b32.xlu0 %v10, 12
    %v12 = vpop.permute.xlu0 %11
    %vm13 = vcmask 130144
    %14 = vst.msk [vmem:[#allocation0] sm:$0x1] %vm13, %v12
    %s15 = scalar_lea.vmem [#allocation1], 2
    %v16 = vld [vmem:[%s15] sm:$0x1]
    %17 = vrot.lane.b32.xlu0 %v16, 8
    %v18 = vpop.permute.xlu0 %17
    %vm19 = vcmask 97344
    %20 = vst.msk [vmem:[#allocation0] sm:$0x1] %vm19, %v18
    %s21 = scalar_lea.vmem [#allocation1], 1
    %v22 = vld [vmem:[%s21] sm:$0x1]
    %23 = vrot.lane.b32.xlu0 %v22, 4
    %v24 = vpop.permute.xlu0 %23
    %vm25 = vcmask 64544
    %26 = vst.msk [vmem:[#allocation0] sm:$0x1] %vm25, %v24
    %s28 = ssub.s32 2, 1
    %v29 = vld [vmem:[#allocation0] sm:%s28]
    %s31 = ssub.s32 2, 1
    %32 = vst [vmem:[%s1] sm:%s31] %v29

// kernel: tile.13
$region0: #{tile.13}
  #allocation2 [shape = 's32[1]{0}', space=sflag, size = 0x4, scoped, tag = 'scoped memory for tile.13']
  %s0 = inlined_call_operand.hbm [shape: f32[4], index: 0, kind: input, shape index: {}]
  %s1 = inlined_call_operand.vmem [shape: f32[4,4], index: 1, kind: output, shape index: {}]
  $region1: #{tile.13} parent=0
    #allocation0 [shape = 'u8[512]{0}', space=vmem, size = 0x400, scoped, tag = 'operand span for operand 0']
    #allocation1 [shape = 's32[1]{0}', space=sflag, size = 0x4, scoped, tag = 'scoped memory for tile.13']
    %2 = vsyncpa [#allocation1], 0
    // Predicated region
    $region2: #{tile.13} parent=1 // pred_check
      _
    $region3: #{tile.13} parent=1 // pred_check_branch
      %4 = sbr.rel (0) target = $region5
    $region4: #{tile.13} parent=1 // pred_region
      %6 = vsyncadd [#allocation1], 0
      %s8 = sshll.u32 %s0, 4
      %s9 = int_to_ptr.hbm [resolvable:$true] %s8
      %s10 = sshll.u32 [#allocation0], 4
      %s11 = int_to_ptr.vmem [resolvable:$true] %s10
      %13 = dma.hbm_to_vmem [thread:$0]  %s9, 16, %s11, [#allocation1]
    $region5: #{tile.13} parent=1 // pred_fallthru
      _
    // Predicated region
    $region6: #{tile.13} parent=1 // pred_check
      _
    $region7: #{tile.13} parent=1 // pred_check_branch
      %15 = sbr.rel (0) target = $region9
    $region8: #{tile.13} parent=1 // pred_region
      %17 = dma.done [#allocation1], 16
    $region9: #{tile.13} parent=1 // pred_fallthru
      _
    %v18 = vld [vmem:[#allocation0] ss:$0 sm:$0xff]
    %19 = vst [vmem:[%s1] sm:$0xf] %v18
    %20 = vsyncpa [#allocation1], 1

// kernel: gate_conv_transpose.1
$region0: #{gate_conv_transpose.1}
  #allocation0 [shape = 'u32[]', space=smem, size = 0x4, offset = 0x4, fixed_abs, tag = 'smem constant byte address 0x4 - core index']
  #allocation1 [shape = 'u32[72,128]{1,0:T(1,128)}', space=vmem, size = 0x9000, scoped, tag = 'internal scratch']
  #allocation2 [shape = 'f32[16,289]{1,0:T(8,128)}', space=vmem, size = 0x6000, scoped, tag = 'scratch operand']
  %s0 = inlined_call_operand.vmem [shape: f32[2,4,18,18], index: 0, kind: input, shape index: {}]
  %s1 = inlined_call_operand.vmem [shape: f32[32,16], index: 1, kind: input, shape index: {}]
  %s2 = inlined_call_operand.vmem [shape: f32[32,1], index: 2, kind: input, shape index: {}]
  %s3 = inlined_call_operand.vmem [shape: f32[2,16,289], index: 3, kind: output, shape index: {}]
  %s4 = sld [smem:[#allocation0]]
  $region45: #{gate_conv_transpose.1} parent=0
    _
  %s6 = ssub.s32 1, %s4
  %s7 = scalar_select 0, %s6, %s4
  loop: start=0, step=1, limit=4
  $region2: #{gate_conv_transpose.1} parent=0 // loop_pre_header
    _
  $region3: #{gate_conv_transpose.1} parent=0 // loop_header
    %s9 = sphi 0, %s13
    %p10 = scmp.ge.s32.totalorder %s9, 4
    %s19 = sphi 0, %s21
    %s22 = sphi 0, %s19
    %s23 = sphi 0, %s22
    %s39 = sphi 0, %s23
    %s43 = sphi 0, %s43
    %s45 = sphi 0, %s43
    %s46 = sphi 0, %s45
    %s60 = sphi 0, %s46
    %s64 = sphi 0, %s64
    %s66 = sphi 0, %s64
    %s67 = sphi 0, %s66
    %s81 = sphi 0, %s67
    %s87 = sphi 0, %s89
    %s90 = sphi 0, %s87
    %s91 = sphi 0, %s90
    %s107 = sphi 0, %s91
  $region4: #{gate_conv_transpose.1} parent=0 // loop_header_branch
    %12 = sbr.rel (%p10) target = $region8
  $region5: #{gate_conv_transpose.1} parent=0 // loop_body
    %s14 = ssub.s32 %s9, 1
    %s15 = ssub.s32 %s9, 2
    %s16 = sadd.s32 %s9, 1
    %s17 = ssub.s32 %s9, %s16
    %p18 = scmp.eq.s32.totalorder %s17, 0
    %s20 = sadd.s32 %s19, 1
    %s21 = scalar_select %p18, %s19, %s20
    %p24 = pneg %p18
    %p25 = scmp.eq.s32.totalorder %s9, 1
    %p26 = por %p24, %p25
    %p27 = scmp.ne.s32.totalorder %s19, %s22
    %p28 = scmp.eq.s32.totalorder %s9, 0
    %p29 = por %p27, %p28
    %p30 = scmp.ne.s32.totalorder %s19, %s22
    %p31 = scmp.eq.s32.totalorder %s14, 1
    %p32 = por %p30, %p31
    %p33 = scmp.ne.s32.totalorder %s22, %s23
    %p34 = scmp.eq.s32.totalorder %s14, 0
    %p35 = por %p33, %p34
    %p36 = scmp.ne.s32.totalorder %s22, %s23
    %p37 = scmp.eq.s32.totalorder %s15, 1
    %p38 = por %p36, %p37
    %p40 = scmp.ne.s32.totalorder %s23, %s39
    %p41 = scmp.eq.s32.totalorder %s15, 0
    %p42 = por %p40, %p41
    %s44 = sadd.s32 %s43, 1
    %p47 = scmp.eq.s32.totalorder %s9, 1
    %p48 = scmp.ne.s32.totalorder %s43, %s45
    %p49 = scmp.eq.s32.totalorder %s9, 0
    %p50 = por %p48, %p49
    %p51 = scmp.ne.s32.totalorder %s43, %s45
    %p52 = scmp.eq.s32.totalorder %s14, 1
    %p53 = por %p51, %p52
    %p54 = scmp.ne.s32.totalorder %s45, %s46
    %p55 = scmp.eq.s32.totalorder %s14, 0
    %p56 = por %p54, %p55
    %p57 = scmp.ne.s32.totalorder %s45, %s46
    %p58 = scmp.eq.s32.totalorder %s15, 1
    %p59 = por %p57, %p58
    %p61 = scmp.ne.s32.totalorder %s46, %s60
    %p62 = scmp.eq.s32.totalorder %s15, 0
    %p63 = por %p61, %p62
    %s65 = sadd.s32 %s64, 1
    %p68 = scmp.eq.s32.totalorder %s9, 1
    %p69 = scmp.ne.s32.totalorder %s64, %s66
    %p70 = scmp.eq.s32.totalorder %s9, 0
    %p71 = por %p69, %p70
    %p72 = scmp.ne.s32.totalorder %s64, %s66
    %p73 = scmp.eq.s32.totalorder %s14, 1
    %p74 = por %p72, %p73
    %p75 = scmp.ne.s32.totalorder %s66, %s67
    %p76 = scmp.eq.s32.totalorder %s14, 0
    %p77 = por %p75, %p76
    %p78 = scmp.ne.s32.totalorder %s66, %s67
    %p79 = scmp.eq.s32.totalorder %s15, 1
    %p80 = por %p78, %p79
    %p82 = scmp.ne.s32.totalorder %s67, %s81
    %p83 = scmp.eq.s32.totalorder %s15, 0
    %p84 = por %p82, %p83
    %s85 = ssub.s32 %s9, %s16
    %p86 = scmp.eq.s32.totalorder %s85, 0
    %s88 = sadd.s32 %s87, 1
    %s89 = scalar_select %p86, %s87, %s88
    %p92 = pneg %p86
    %p93 = scmp.eq.s32.totalorder %s9, 1
    %p94 = por %p92, %p93
    %p95 = scmp.ne.s32.totalorder %s87, %s90
    %p96 = scmp.eq.s32.totalorder %s9, 0
    %p97 = por %p95, %p96
    %p98 = scmp.ne.s32.totalorder %s87, %s90
    %p99 = scmp.eq.s32.totalorder %s14, 1
    %p100 = por %p98, %p99
    %p101 = scmp.ne.s32.totalorder %s90, %s91
    %p102 = scmp.eq.s32.totalorder %s14, 0
    %p103 = por %p101, %p102
    %p104 = scmp.ne.s32.totalorder %s90, %s91
    %p105 = scmp.eq.s32.totalorder %s15, 1
    %p106 = por %p104, %p105
    %p108 = scmp.ne.s32.totalorder %s91, %s107
    %p109 = scmp.eq.s32.totalorder %s15, 0
    %p110 = por %p108, %p109
    %p111 = scmp.le.s32.totalorder 1, %s9
    %p112 = scmp.lt.s32.totalorder %s9, 3
    %p113 = pnand %p111, %p112
    %p114 = pneg %p113
    // Predicated region
    $region9: #{gate_conv_transpose.1} parent=5 // pred_check
      _
    $region10: #{gate_conv_transpose.1} parent=5 // pred_check_branch
      %116 = sbr.rel (%p113) target = $region12
    $region11: #{gate_conv_transpose.1} parent=5 // pred_region
      %s117 = ssub.s32 %s9, 1
      // Predicated region
      $region13: #{gate_conv_transpose.1} parent=11 // pred_check
        %p118 = pneg %p56
      $region14: #{gate_conv_transpose.1} parent=11 // pred_check_branch
        %120 = sbr.rel (%p118) target = $region16
      $region15: #{gate_conv_transpose.1} parent=11 // pred_region
        _
      $region16: #{gate_conv_transpose.1} parent=11 // pred_fallthru
        _
      // Predicated region
      $region17: #{gate_conv_transpose.1} parent=11 // pred_check
        %p121 = pneg %p77
      $region18: #{gate_conv_transpose.1} parent=11 // pred_check_branch
        %123 = sbr.rel (%p121) target = $region20
      $region19: #{gate_conv_transpose.1} parent=11 // pred_region
        _
      $region20: #{gate_conv_transpose.1} parent=11 // pred_fallthru
        _
    $region12: #{gate_conv_transpose.1} parent=5 // pred_fallthru
      _
    %p124 = scmp.lt.s32.totalorder %s9, 2
    // Predicated region
    $region21: #{gate_conv_transpose.1} parent=5 // pred_check
      %p125 = pneg %p124
    $region22: #{gate_conv_transpose.1} parent=5 // pred_check_branch
      %127 = sbr.rel (%p125) target = $region24
    $region23: #{gate_conv_transpose.1} parent=5 // pred_region
      // Predicated region
      $region25: #{gate_conv_transpose.1} parent=23 // pred_check
        %p128 = pneg %p29
      $region26: #{gate_conv_transpose.1} parent=23 // pred_check_branch
        %130 = sbr.rel (%p128) target = $region28
      $region27: #{gate_conv_transpose.1} parent=23 // pred_region
        %p131 = scmp.lt.s32.totalorder %s9, 1
        %s132 = scalar_select %p131, %s9, 1
        %s133 = smul.addr %s132, 12
        %s134 = smul.addr %s133, 8
        %s135 = scalar_lea.vmem %s0, %s134
      $region28: #{gate_conv_transpose.1} parent=23 // pred_fallthru
        _
    $region24: #{gate_conv_transpose.1} parent=5 // pred_fallthru
      _
    %p136 = scmp.le.s32.totalorder 1, %s9
    %p137 = scmp.lt.s32.totalorder %s9, 3
    %p138 = pnand %p136, %p137
    %p139 = pneg %p138
    // Predicated region
    $region29: #{gate_conv_transpose.1} parent=5 // pred_check
      _
    $region30: #{gate_conv_transpose.1} parent=5 // pred_check_branch
      %141 = sbr.rel (%p138) target = $region32
    $region31: #{gate_conv_transpose.1} parent=5 // pred_region
      %s142 = ssub.s32 %s9, 1
      %p143 = scmp.lt.s32.totalorder %s14, 1
      %s144 = scalar_select %p143, %s14, 1
      %s145 = smul.addr %s144, 12
      %s146 = smul.addr %s145, 8
      %s147 = scalar_lea.vmem %s0, %s146
      %p148 = pneg %p35
      %p149 = pneg %p32
      %p150 = pneg %p56
      %p151 = pneg %p53
      %p152 = pneg %p77
      %p153 = pneg %p74
      %p154 = pneg %p103
      %p155 = pneg %p100
      %p156 = scmp.lt.s32.totalorder %s14, 1
      %s157 = scalar_select %p156, %s14, 1
      %s158 = smul.addr %s157, 6
      %s159 = smul.addr %s158, 8
      %s160 = scalar_lea.vmem %s3, %s159
      %p161 = scmp.lt.s32.totalorder %s14, 1
      %s162 = scalar_select %p161, %s14, 1
      %s163 = smul.addr %s162, 12
      %s164 = smul.addr %s163, 8
      %s165 = scalar_lea.vmem %s0, %s164
      %p166 = scmp.lt.s32.totalorder %s14, 1
      %s167 = scalar_select %p166, %s14, 1
      %s168 = smul.addr %s167, 6
      %s169 = smul.addr %s168, 8
      %s170 = scalar_lea.vmem %s3, %s169
      %v171 = vld [vmem:[%s165] sm:$0xff]
      %v172 = vld [vmem:[%s165 + $0x8] sm:$0xff]
      %v173 = vld [vmem:[%s165 + $0x10] sm:$0x3]
      %v174 = vld [vmem:[%s165 + $0x18] sm:$0xff]
      %v175 = vld [vmem:[%s165 + $0x20] sm:$0xff]
      %v176 = vld [vmem:[%s165 + $0x28] sm:$0x3]
      %v177 = vld [vmem:[%s165 + $0x30] sm:$0xff]
      %v178 = vld [vmem:[%s165 + $0x38] sm:$0xff]
      %v179 = vld [vmem:[%s165 + $0x40] sm:$0x3]
      %v180 = vld [vmem:[%s165 + $0x48] sm:$0xff]
      %v181 = vld [vmem:[%s165 + $0x50] sm:$0xff]
      %v182 = vld [vmem:[%s165 + $0x58] sm:$0x3]
      %v183 = vrot.slane %v177, 4
      %vm184 = vcmask 1047556
      %v185 = vsel %vm184, %v183, %v171
      %v186 = vrot.slane %v171, 4
      %v187 = vsel %vm184, %v177, %v186
      %v189 = vunpack.c.l.s4 1983009808
      %v190 = vunpack.c.0.s8 %v189
      %v191 = vperm.slane %v185, %v190
      %v193 = vunpack.c.l.s4 1983009808
      %v194 = vunpack.c.0.s8 %v193
      %v195 = vperm.slane %v187, %v194
      %v196 = vrot.slane %v180, 4
      %v197 = vsel %vm184, %v196, %v174
      %v198 = vrot.slane %v174, 4
      %v199 = vsel %vm184, %v180, %v198
      %v201 = vunpack.c.l.s4 1983009808
      %v202 = vunpack.c.0.s8 %v201
      %v203 = vperm.slane %v197, %v202
      %v205 = vunpack.c.l.s4 1983009808
      %v206 = vunpack.c.0.s8 %v205
      %v207 = vperm.slane %v199, %v206
      %v208 = vrot.slane %v203, 4
      %v209 = vsel %vm184, %v208, %v191
      %v210 = vrot.slane %v191, 4
      %v211 = vsel %vm184, %v203, %v210
      %v213 = vunpack.c.l.s4 1934713408
      %v214 = vunpack.c.0.s8 %v213
      %v215 = vperm.slane %v209, %v214
      %v217 = vunpack.c.l.s4 1934713408
      %v218 = vunpack.c.0.s8 %v217
      %v219 = vperm.slane %v211, %v218
      %v220 = vrot.slane %v207, 4
      %v221 = vsel %vm184, %v220, %v195
      %v222 = vrot.slane %v195, 4
      %v223 = vsel %vm184, %v207, %v222
      %v225 = vunpack.c.l.s4 1934713408
      %v226 = vunpack.c.0.s8 %v225
      %v227 = vperm.slane %v221, %v226
      %v229 = vunpack.c.l.s4 1934713408
      %v230 = vunpack.c.0.s8 %v229
      %v231 = vperm.slane %v223, %v230
      %v232 = vrot.slane %v215, 4
      %v233 = vsel %vm184, 0.0, %v232
      %v234 = vrot.slane %v219, 4
      %v235 = vsel %vm184, 0.0, %v234
      %v236 = vrot.slane %v227, 4
      %v237 = vsel %vm184, 0.0, %v236
      %v238 = vrot.slane %v231, 4
      %v239 = vsel %vm184, 0.0, %v238
      %v240 = vrot.slane %v178, 4
      %v241 = vsel %vm184, %v240, %v172
      %v242 = vrot.slane %v172, 4
      %v243 = vsel %vm184, %v178, %v242
      %v245 = vunpack.c.l.s4 1983009808
      %v246 = vunpack.c.0.s8 %v245
      %v247 = vperm.slane %v241, %v246
      %v249 = vunpack.c.l.s4 1983009808
      %v250 = vunpack.c.0.s8 %v249
      %v251 = vperm.slane %v243, %v250
      %v252 = vrot.slane %v181, 4
      %v253 = vsel %vm184, %v252, %v175
      %v254 = vrot.slane %v175, 4
      %v255 = vsel %vm184, %v181, %v254
      %v257 = vunpack.c.l.s4 1983009808
      %v258 = vunpack.c.0.s8 %v257
      %v259 = vperm.slane %v253, %v258
      %v261 = vunpack.c.l.s4 1983009808
      %v262 = vunpack.c.0.s8 %v261
      %v263 = vperm.slane %v255, %v262
      %v264 = vrot.slane %v259, 4
      %v265 = vsel %vm184, %v264, %v247
      %v266 = vrot.slane %v247, 4
      %v267 = vsel %vm184, %v259, %v266
      %v269 = vunpack.c.l.s4 1934713408
      %v270 = vunpack.c.0.s8 %v269
      %v271 = vperm.slane %v265, %v270
      %v273 = vunpack.c.l.s4 1934713408
      %v274 = vunpack.c.0.s8 %v273
      %v275 = vperm.slane %v267, %v274
      %v276 = vrot.slane %v263, 4
      %v277 = vsel %vm184, %v276, %v251
      %v278 = vrot.slane %v251, 4
      %v279 = vsel %vm184, %v263, %v278
      %v281 = vunpack.c.l.s4 1934713408
      %v282 = vunpack.c.0.s8 %v281
      %v283 = vperm.slane %v277, %v282
      %v285 = vunpack.c.l.s4 1934713408
      %v286 = vunpack.c.0.s8 %v285
      %v287 = vperm.slane %v279, %v286
      %v288 = vrot.slane %v271, 4
      %v289 = vsel %vm184, 0.0, %v288
      %v290 = vrot.slane %v275, 4
      %v291 = vsel %vm184, 0.0, %v290
      %v292 = vrot.slane %v283, 4
      %v293 = vsel %vm184, 0.0, %v292
      %v294 = vrot.slane %v287, 4
      %v295 = vsel %vm184, 0.0, %v294
      %v296 = vrot.slane %v179, 4
      %v297 = vsel %vm184, %v296, %v173
      %v299 = vunpack.c.l.s4 1983009808
      %v300 = vunpack.c.0.s8 %v299
      %v301 = vperm.slane %v297, %v300
      %v302 = vrot.slane %v182, 4
      %v303 = vsel %vm184, %v302, %v176
      %v305 = vunpack.c.l.s4 1983009808
      %v306 = vunpack.c.0.s8 %v305
      %v307 = vperm.slane %v303, %v306
      %v308 = vrot.slane %v307, 4
      %v309 = vsel %vm184, %v308, %v301
      %v311 = vunpack.c.l.s4 1934713408
      %v312 = vunpack.c.0.s8 %v311
      %v313 = vperm.slane %v309, %v312
      %315 = vrot.lane.b32.xlu0 %v233, 17
      %v316 = vpop.permute.xlu0 %315
      %319 = vrot.lane.b32.xlu0 %v219, 34
      %v320 = vpop.permute.xlu0 %319
      %323 = vrot.lane.b32.xlu0 %v235, 51
      %v324 = vpop.permute.xlu0 %323
      %327 = vrot.lane.b32.xlu0 %v227, 68
      %v328 = vpop.permute.xlu0 %327
      %331 = vrot.lane.b32.xlu0 %v237, 85
      %v332 = vpop.permute.xlu0 %331
      %335 = vrot.lane.b32.xlu0 %v231, 102
      %v336 = vpop.permute.xlu0 %335
      %339 = vrot.lane.b32.xlu0 %v239, 119
      %v340 = vpop.permute.xlu0 %339
      %343 = vrot.lane.b32.xlu0 %v271, 8
      %v344 = vpop.permute.xlu0 %343
      %347 = vrot.lane.b32.xlu0 %v289, 25
      %v348 = vpop.permute.xlu0 %347
      %351 = vrot.lane.b32.xlu0 %v275, 42
      %v352 = vpop.permute.xlu0 %351
      %355 = vrot.lane.b32.xlu0 %v291, 59
      %v356 = vpop.permute.xlu0 %355
      %359 = vrot.lane.b32.xlu0 %v283, 76
      %v360 = vpop.permute.xlu0 %359
      %363 = vrot.lane.b32.xlu0 %v293, 93
      %v364 = vpop.permute.xlu0 %363
      %367 = vrot.lane.b32.xlu0 %v287, 110
      %v368 = vpop.permute.xlu0 %367
      %371 = vrot.lane.b32.xlu0 %v295, 127
      %v372 = vpop.permute.xlu0 %371
      %375 = vrot.lane.b32.xlu0 %v313, 16
      %v376 = vpop.permute.xlu0 %375
      %vm378 = vcmask 138240
      %v379 = vsel %vm378, %v215, %v316
      %vm380 = vcmask 277504
      %v381 = vsel %vm380, %v379, %v320
      %vm382 = vcmask 416768
      %v383 = vsel %vm382, %v381, %v324
      %vm384 = vcmask 556032
      %v385 = vsel %vm384, %v383, %v328
      %vm386 = vcmask 695296
      %v387 = vsel %vm386, %v385, %v332
      %vm388 = vcmask 834560
      %v389 = vsel %vm388, %v387, %v336
      %vm390 = vcmask 973824
      %v391 = vsel %vm390, %v389, %v340
      %vm392 = vcmask 64512
      %v393 = vsel %vm392, %v340, %v344
      %vm394 = vcmask 203776
      %v395 = vsel %vm394, %v393, %v348
      %vm396 = vcmask 343040
      %v397 = vsel %vm396, %v395, %v352
      %vm398 = vcmask 482304
      %v399 = vsel %vm398, %v397, %v356
      %vm400 = vcmask 621568
      %v401 = vsel %vm400, %v399, %v360
      %vm402 = vcmask 760832
      %v403 = vsel %vm402, %v401, %v364
      %vm404 = vcmask 900096
      %v405 = vsel %vm404, %v403, %v368
      %vm406 = vcmask 1039360
      %v407 = vsel %vm406, %v405, %v372
      %vm408 = vcmask 130048
      %v409 = vsel %vm408, %v372, %v376
      %410 = vst [vmem:[#allocation2] sm:$0xf] %v391
      %411 = vst [vmem:[#allocation2 + $0x8] sm:$0xf] %v407
      %vm412 = vcmask 265216
      %413 = vst.msk [vmem:[#allocation2 + $0x10] sm:$0xf] %vm412, %v409
      %426 = vrot.lane.b32.xlu0 %v171, 127
      %v427 = vpop.permute.xlu0 %426
      %428 = vrot.lane.b32.xlu0 %v172, 127
      %v429 = vpop.permute.xlu0 %428
      %430 = vrot.lane.b32.xlu0 %v173, 127
      %v431 = vpop.permute.xlu0 %430
      %432 = vrot.lane.b32.xlu0 %v174, 127
      %v433 = vpop.permute.xlu0 %432
      %434 = vrot.lane.b32.xlu0 %v175, 127
      %v435 = vpop.permute.xlu0 %434
      %436 = vrot.lane.b32.xlu0 %v176, 127
      %v437 = vpop.permute.xlu0 %436
      %438 = vrot.lane.b32.xlu0 %v177, 127
      %v439 = vpop.permute.xlu0 %438
      %440 = vrot.lane.b32.xlu0 %v178, 127
      %v441 = vpop.permute.xlu0 %440
      %442 = vrot.lane.b32.xlu0 %v179, 127
      %v443 = vpop.permute.xlu0 %442
      %444 = vrot.lane.b32.xlu0 %v180, 127
      %v445 = vpop.permute.xlu0 %444
      %446 = vrot.lane.b32.xlu0 %v181, 127
      %v447 = vpop.permute.xlu0 %446
      %448 = vrot.lane.b32.xlu0 %v182, 127
      %v449 = vpop.permute.xlu0 %448
      %v462 = vrot.slane %v439, 4
      %v463 = vsel %vm184, %v462, %v427
      %v464 = vrot.slane %v427, 4
      %v465 = vsel %vm184, %v439, %v464
      %v467 = vunpack.c.l.s4 1983009808
      %v468 = vunpack.c.0.s8 %v467
      %v469 = vperm.slane %v463, %v468
      %v471 = vunpack.c.l.s4 1983009808
      %v472 = vunpack.c.0.s8 %v471
      %v473 = vperm.slane %v465, %v472
      %v474 = vrot.slane %v445, 4
      %v475 = vsel %vm184, %v474, %v433
      %v476 = vrot.slane %v433, 4
      %v477 = vsel %vm184, %v445, %v476
      %v479 = vunpack.c.l.s4 1983009808
      %v480 = vunpack.c.0.s8 %v479
      %v481 = vperm.slane %v475, %v480
      %v483 = vunpack.c.l.s4 1983009808
      %v484 = vunpack.c.0.s8 %v483
      %v485 = vperm.slane %v477, %v484
      %v486 = vrot.slane %v481, 4
      %v487 = vsel %vm184, %v486, %v469
      %v488 = vrot.slane %v469, 4
      %v489 = vsel %vm184, %v481, %v488
      %v491 = vunpack.c.l.s4 1934713408
      %v492 = vunpack.c.0.s8 %v491
      %v493 = vperm.slane %v487, %v492
      %v495 = vunpack.c.l.s4 1934713408
      %v496 = vunpack.c.0.s8 %v495
      %v497 = vperm.slane %v489, %v496
      %v498 = vrot.slane %v485, 4
      %v499 = vsel %vm184, %v498, %v473
      %v500 = vrot.slane %v473, 4
      %v501 = vsel %vm184, %v485, %v500
      %v503 = vunpack.c.l.s4 1934713408
      %v504 = vunpack.c.0.s8 %v503
      %v505 = vperm.slane %v499, %v504
      %v507 = vunpack.c.l.s4 1934713408
      %v508 = vunpack.c.0.s8 %v507
      %v509 = vperm.slane %v501, %v508
      %v510 = vrot.slane %v493, 4
      %v511 = vsel %vm184, 0.0, %v510
      %v512 = vrot.slane %v497, 4
      %v513 = vsel %vm184, 0.0, %v512
      %v514 = vrot.slane %v505, 4
      %v515 = vsel %vm184, 0.0, %v514
      %v516 = vrot.slane %v509, 4
      %v517 = vsel %vm184, 0.0, %v516
      %v518 = vrot.slane %v441, 4
      %v519 = vsel %vm184, %v518, %v429
      %v520 = vrot.slane %v429, 4
      %v521 = vsel %vm184, %v441, %v520
      %v523 = vunpack.c.l.s4 1983009808
      %v524 = vunpack.c.0.s8 %v523
      %v525 = vperm.slane %v519, %v524
      %v527 = vunpack.c.l.s4 1983009808
      %v528 = vunpack.c.0.s8 %v527
      %v529 = vperm.slane %v521, %v528
      %v530 = vrot.slane %v447, 4
      %v531 = vsel %vm184, %v530, %v435
      %v532 = vrot.slane %v435, 4
      %v533 = vsel %vm184, %v447, %v532
      %v535 = vunpack.c.l.s4 1983009808
      %v536 = vunpack.c.0.s8 %v535
      %v537 = vperm.slane %v531, %v536
      %v539 = vunpack.c.l.s4 1983009808
      %v540 = vunpack.c.0.s8 %v539
      %v541 = vperm.slane %v533, %v540
      %v542 = vrot.slane %v537, 4
      %v543 = vsel %vm184, %v542, %v525
      %v544 = vrot.slane %v525, 4
      %v545 = vsel %vm184, %v537, %v544
      %v547 = vunpack.c.l.s4 1934713408
      %v548 = vunpack.c.0.s8 %v547
      %v549 = vperm.slane %v543, %v548
      %v551 = vunpack.c.l.s4 1934713408
      %v552 = vunpack.c.0.s8 %v551
      %v553 = vperm.slane %v545, %v552
      %v554 = vrot.slane %v541, 4
      %v555 = vsel %vm184, %v554, %v529
      %v556 = vrot.slane %v529, 4
      %v557 = vsel %vm184, %v541, %v556
      %v559 = vunpack.c.l.s4 1934713408
      %v560 = vunpack.c.0.s8 %v559
      %v561 = vperm.slane %v555, %v560
      %v563 = vunpack.c.l.s4 1934713408
      %v564 = vunpack.c.0.s8 %v563
      %v565 = vperm.slane %v557, %v564
      %v566 = vrot.slane %v549, 4
      %v567 = vsel %vm184, 0.0, %v566
      %v568 = vrot.slane %v553, 4
      %v569 = vsel %vm184, 0.0, %v568
      %v570 = vrot.slane %v561, 4
      %v571 = vsel %vm184, 0.0, %v570
      %v572 = vrot.slane %v565, 4
      %v573 = vsel %vm184, 0.0, %v572
      %v574 = vrot.slane %v443, 4
      %v575 = vsel %vm184, %v574, %v431
      %v577 = vunpack.c.l.s4 1983009808
      %v578 = vunpack.c.0.s8 %v577
      %v579 = vperm.slane %v575, %v578
      %v580 = vrot.slane %v449, 4
      %v581 = vsel %vm184, %v580, %v437
      %v583 = vunpack.c.l.s4 1983009808
      %v584 = vunpack.c.0.s8 %v583
      %v585 = vperm.slane %v581, %v584
      %v586 = vrot.slane %v585, 4
      %v587 = vsel %vm184, %v586, %v579
      %v589 = vunpack.c.l.s4 1934713408
      %v590 = vunpack.c.0.s8 %v589
      %v591 = vperm.slane %v587, %v590
      %593 = vrot.lane.b32.xlu0 %v511, 17
      %v594 = vpop.permute.xlu0 %593
      %597 = vrot.lane.b32.xlu0 %v497, 34
      %v598 = vpop.permute.xlu0 %597
      %601 = vrot.lane.b32.xlu0 %v513, 51
      %v602 = vpop.permute.xlu0 %601
      %605 = vrot.lane.b32.xlu0 %v505, 68
      %v606 = vpop.permute.xlu0 %605
      %609 = vrot.lane.b32.xlu0 %v515, 85
      %v610 = vpop.permute.xlu0 %609
      %613 = vrot.lane.b32.xlu0 %v509, 102
      %v614 = vpop.permute.xlu0 %613
      %617 = vrot.lane.b32.xlu0 %v517, 119
      %v618 = vpop.permute.xlu0 %617
      %621 = vrot.lane.b32.xlu0 %v549, 8
      %v622 = vpop.permute.xlu0 %621
      %625 = vrot.lane.b32.xlu0 %v567, 25
      %v626 = vpop.permute.xlu0 %625
      %629 = vrot.lane.b32.xlu0 %v553, 42
      %v630 = vpop.permute.xlu0 %629
      %633 = vrot.lane.b32.xlu0 %v569, 59
      %v634 = vpop.permute.xlu0 %633
      %637 = vrot.lane.b32.xlu0 %v561, 76
      %v638 = vpop.permute.xlu0 %637
      %641 = vrot.lane.b32.xlu0 %v571, 93
      %v642 = vpop.permute.xlu0 %641
      %645 = vrot.lane.b32.xlu0 %v565, 110
      %v646 = vpop.permute.xlu0 %645
      %649 = vrot.lane.b32.xlu0 %v573, 127
      %v650 = vpop.permute.xlu0 %649
      %653 = vrot.lane.b32.xlu0 %v591, 16
      %v654 = vpop.permute.xlu0 %653
      %v656 = vsel %vm378, %v493, %v594
      %v657 = vsel %vm380, %v656, %v598
      %v658 = vsel %vm382, %v657, %v602
      %v659 = vsel %vm384, %v658, %v606
      %v660 = vsel %vm386, %v659, %v610
      %v661 = vsel %vm388, %v660, %v614
      %v662 = vsel %vm390, %v661, %v618
      %v663 = vsel %vm392, %v618, %v622
      %v664 = vsel %vm394, %v663, %v626
      %v665 = vsel %vm396, %v664, %v630
      %v666 = vsel %vm398, %v665, %v634
      %v667 = vsel %vm400, %v666, %v638
      %v668 = vsel %vm402, %v667, %v642
      %v669 = vsel %vm404, %v668, %v646
      %v670 = vsel %vm406, %v669, %v650
      %v671 = vsel %vm408, %v650, %v654
      %v675 = vrot.slane %v662, 4
      %v676 = vrot.slane %v670, 4
      %v677 = vrot.slane %v671, 4
      %681 = vst [vmem:[#allocation2] sm:$0xf0] %v675
      %682 = vst [vmem:[#allocation2 + $0x8] sm:$0xf0] %v676
      %vm683 = vcmask 269316
      %684 = vst.msk [vmem:[#allocation2 + $0x10] sm:$0xf0] %vm683, %v677
      %vm685 = vcmask 1046528
      %v686 = vrot.slane %v171, 1
      %v687 = vrot.slane %v172, 1
      %v688 = vsel %vm685, %v686, %v687
      %v689 = vrot.slane %v173, 1
      %v690 = vsel %vm685, %v687, %v689
      %v691 = vrot.slane %v174, 1
      %v692 = vrot.slane %v175, 1
      %v693 = vsel %vm685, %v691, %v692
      %v694 = vrot.slane %v176, 1
      %v695 = vsel %vm685, %v692, %v694
      %v696 = vrot.slane %v177, 1
      %v697 = vrot.slane %v178, 1
      %v698 = vsel %vm685, %v696, %v697
      %v699 = vrot.slane %v179, 1
      %v700 = vsel %vm685, %v697, %v699
      %v701 = vrot.slane %v180, 1
      %v702 = vrot.slane %v181, 1
      %v703 = vsel %vm685, %v701, %v702
      %v704 = vrot.slane %v182, 1
      %v705 = vsel %vm685, %v702, %v704
      %v718 = vrot.slane %v698, 4
      %v719 = vsel %vm184, %v718, %v688
      %v720 = vrot.slane %v688, 4
      %v721 = vsel %vm184, %v698, %v720
      %v723 = vunpack.c.l.s4 1983009808
      %v724 = vunpack.c.0.s8 %v723
      %v725 = vperm.slane %v719, %v724
      %v727 = vunpack.c.l.s4 1983009808
      %v728 = vunpack.c.0.s8 %v727
      %v729 = vperm.slane %v721, %v728
      %v730 = vrot.slane %v703, 4
      %v731 = vsel %vm184, %v730, %v693
      %v732 = vrot.slane %v693, 4
      %v733 = vsel %vm184, %v703, %v732
      %v735 = vunpack.c.l.s4 1983009808
      %v736 = vunpack.c.0.s8 %v735
      %v737 = vperm.slane %v731, %v736
      %v739 = vunpack.c.l.s4 1983009808
      %v740 = vunpack.c.0.s8 %v739
      %v741 = vperm.slane %v733, %v740
      %v742 = vrot.slane %v737, 4
      %v743 = vsel %vm184, %v742, %v725
      %v744 = vrot.slane %v725, 4
      %v745 = vsel %vm184, %v737, %v744
      %v747 = vunpack.c.l.s4 1934713408
      %v748 = vunpack.c.0.s8 %v747
      %v749 = vperm.slane %v743, %v748
      %v751 = vunpack.c.l.s4 1934713408
      %v752 = vunpack.c.0.s8 %v751
      %v753 = vperm.slane %v745, %v752
      %v754 = vrot.slane %v741, 4
      %v755 = vsel %vm184, %v754, %v729
      %v756 = vrot.slane %v729, 4
      %v757 = vsel %vm184, %v741, %v756
      %v759 = vunpack.c.l.s4 1934713408
      %v760 = vunpack.c.0.s8 %v759
      %v761 = vperm.slane %v755, %v760
      %v763 = vunpack.c.l.s4 1934713408
      %v764 = vunpack.c.0.s8 %v763
      %v765 = vperm.slane %v757, %v764
      %v766 = vrot.slane %v749, 4
      %v767 = vsel %vm184, 0.0, %v766
      %v768 = vrot.slane %v753, 4
      %v769 = vsel %vm184, 0.0, %v768
      %v770 = vrot.slane %v761, 4
      %v771 = vsel %vm184, 0.0, %v770
      %v772 = vrot.slane %v765, 4
      %v773 = vsel %vm184, 0.0, %v772
      %v774 = vrot.slane %v700, 4
      %v775 = vsel %vm184, %v774, %v690
      %v776 = vrot.slane %v690, 4
      %v777 = vsel %vm184, %v700, %v776
      %v779 = vunpack.c.l.s4 1983009808
      %v780 = vunpack.c.0.s8 %v779
      %v781 = vperm.slane %v775, %v780
      %v783 = vunpack.c.l.s4 1983009808
      %v784 = vunpack.c.0.s8 %v783
      %v785 = vperm.slane %v777, %v784
      %v786 = vrot.slane %v705, 4
      %v787 = vsel %vm184, %v786, %v695
      %v788 = vrot.slane %v695, 4
      %v789 = vsel %vm184, %v705, %v788
      %v791 = vunpack.c.l.s4 1983009808
      %v792 = vunpack.c.0.s8 %v791
      %v793 = vperm.slane %v787, %v792
      %v795 = vunpack.c.l.s4 1983009808
      %v796 = vunpack.c.0.s8 %v795
      %v797 = vperm.slane %v789, %v796
      %v798 = vrot.slane %v793, 4
      %v799 = vsel %vm184, %v798, %v781
      %v800 = vrot.slane %v781, 4
      %v801 = vsel %vm184, %v793, %v800
      %v803 = vunpack.c.l.s4 1934713408
      %v804 = vunpack.c.0.s8 %v803
      %v805 = vperm.slane %v799, %v804
      %v807 = vunpack.c.l.s4 1934713408
      %v808 = vunpack.c.0.s8 %v807
      %v809 = vperm.slane %v801, %v808
      %v810 = vrot.slane %v797, 4
      %v811 = vsel %vm184, %v810, %v785
      %v812 = vrot.slane %v785, 4
      %v813 = vsel %vm184, %v797, %v812
      %v815 = vunpack.c.l.s4 1934713408
      %v816 = vunpack.c.0.s8 %v815
      %v817 = vperm.slane %v811, %v816
      %v819 = vunpack.c.l.s4 1934713408
      %v820 = vunpack.c.0.s8 %v819
      %v821 = vperm.slane %v813, %v820
      %v822 = vrot.slane %v805, 4
      %v823 = vsel %vm184, 0.0, %v822
      %v824 = vrot.slane %v809, 4
      %v825 = vsel %vm184, 0.0, %v824
      %v826 = vrot.slane %v817, 4
      %v827 = vsel %vm184, 0.0, %v826
      %v828 = vrot.slane %v821, 4
      %v829 = vsel %vm184, 0.0, %v828
      %v830 = vrot.slane %v699, 4
      %v831 = vsel %vm184, %v830, %v689
      %v833 = vunpack.c.l.s4 1983009808
      %v834 = vunpack.c.0.s8 %v833
      %v835 = vperm.slane %v831, %v834
      %v836 = vrot.slane %v704, 4
      %v837 = vsel %vm184, %v836, %v694
      %v839 = vunpack.c.l.s4 1983009808
      %v840 = vunpack.c.0.s8 %v839
      %v841 = vperm.slane %v837, %v840
      %v842 = vrot.slane %v841, 4
      %v843 = vsel %vm184, %v842, %v835
      %v845 = vunpack.c.l.s4 1934713408
      %v846 = vunpack.c.0.s8 %v845
      %v847 = vperm.slane %v843, %v846
      %849 = vrot.lane.b32.xlu0 %v767, 17
      %v850 = vpop.permute.xlu0 %849
      %853 = vrot.lane.b32.xlu0 %v753, 34
      %v854 = vpop.permute.xlu0 %853
      %857 = vrot.lane.b32.xlu0 %v769, 51
      %v858 = vpop.permute.xlu0 %857
      %861 = vrot.lane.b32.xlu0 %v761, 68
      %v862 = vpop.permute.xlu0 %861
      %865 = vrot.lane.b32.xlu0 %v771, 85
      %v866 = vpop.permute.xlu0 %865
      %869 = vrot.lane.b32.xlu0 %v765, 102
      %v870 = vpop.permute.xlu0 %869
      %873 = vrot.lane.b32.xlu0 %v773, 119
      %v874 = vpop.permute.xlu0 %873
      %877 = vrot.lane.b32.xlu0 %v805, 8
      %v878 = vpop.permute.xlu0 %877
      %881 = vrot.lane.b32.xlu0 %v823, 25
      %v882 = vpop.permute.xlu0 %881
      %885 = vrot.lane.b32.xlu0 %v809, 42
      %v886 = vpop.permute.xlu0 %885
      %889 = vrot.lane.b32.xlu0 %v825, 59
      %v890 = vpop.permute.xlu0 %889
      %893 = vrot.lane.b32.xlu0 %v817, 76
      %v894 = vpop.permute.xlu0 %893
      %897 = vrot.lane.b32.xlu0 %v827, 93
      %v898 = vpop.permute.xlu0 %897
      %901 = vrot.lane.b32.xlu0 %v821, 110
      %v902 = vpop.permute.xlu0 %901
      %905 = vrot.lane.b32.xlu0 %v829, 127
      %v906 = vpop.permute.xlu0 %905
      %909 = vrot.lane.b32.xlu0 %v847, 16
      %v910 = vpop.permute.xlu0 %909
      %v912 = vsel %vm378, %v749, %v850
      %v913 = vsel %vm380, %v912, %v854
      %v914 = vsel %vm382, %v913, %v858
      %v915 = vsel %vm384, %v914, %v862
      %v916 = vsel %vm386, %v915, %v866
      %v917 = vsel %vm388, %v916, %v870
      %v918 = vsel %vm390, %v917, %v874
      %v919 = vsel %vm392, %v874, %v878
      %v920 = vsel %vm394, %v919, %v882
      %v921 = vsel %vm396, %v920, %v886
      %v922 = vsel %vm398, %v921, %v890
      %v923 = vsel %vm400, %v922, %v894
      %v924 = vsel %vm402, %v923, %v898
      %v925 = vsel %vm404, %v924, %v902
      %v926 = vsel %vm406, %v925, %v906
      %v927 = vsel %vm408, %v906, %v910
      %928 = vst [vmem:[#allocation2 + $0x18] sm:$0xf] %v918
      %929 = vst [vmem:[#allocation2 + $0x20] sm:$0xf] %v926
      %930 = vst.msk [vmem:[#allocation2 + $0x28] sm:$0xf] %vm412, %v927
      %931 = vrot.lane.b32.xlu0 %v688, 127
      %v932 = vpop.permute.xlu0 %931
      %933 = vrot.lane.b32.xlu0 %v690, 127
      %v934 = vpop.permute.xlu0 %933
      %935 = vrot.lane.b32.xlu0 %v689, 127
      %v936 = vpop.permute.xlu0 %935
      %937 = vrot.lane.b32.xlu0 %v693, 127
      %v938 = vpop.permute.xlu0 %937
      %939 = vrot.lane.b32.xlu0 %v695, 127
      %v940 = vpop.permute.xlu0 %939
      %941 = vrot.lane.b32.xlu0 %v694, 127
      %v942 = vpop.permute.xlu0 %941
      %943 = vrot.lane.b32.xlu0 %v698, 127
      %v944 = vpop.permute.xlu0 %943
      %945 = vrot.lane.b32.xlu0 %v700, 127
      %v946 = vpop.permute.xlu0 %945
      %947 = vrot.lane.b32.xlu0 %v699, 127
      %v948 = vpop.permute.xlu0 %947
      %949 = vrot.lane.b32.xlu0 %v703, 127
      %v950 = vpop.permute.xlu0 %949
      %951 = vrot.lane.b32.xlu0 %v705, 127
      %v952 = vpop.permute.xlu0 %951
      %953 = vrot.lane.b32.xlu0 %v704, 127
      %v954 = vpop.permute.xlu0 %953
      %v967 = vrot.slane %v944, 4
      %v968 = vsel %vm184, %v967, %v932
      %v969 = vrot.slane %v932, 4
      %v970 = vsel %vm184, %v944, %v969
      %v972 = vunpack.c.l.s4 1983009808
      %v973 = vunpack.c.0.s8 %v972
      %v974 = vperm.slane %v968, %v973
      %v976 = vunpack.c.l.s4 1983009808
      %v977 = vunpack.c.0.s8 %v976
      %v978 = vperm.slane %v970, %v977
      %v979 = vrot.slane %v950, 4
      %v980 = vsel %vm184, %v979, %v938
      %v981 = vrot.slane %v938, 4
      %v982 = vsel %vm184, %v950, %v981
      %v984 = vunpack.c.l.s4 1983009808
      %v985 = vunpack.c.0.s8 %v984
      %v986 = vperm.slane %v980, %v985
      %v988 = vunpack.c.l.s4 1983009808
      %v989 = vunpack.c.0.s8 %v988
      %v990 = vperm.slane %v982, %v989
      %v991 = vrot.slane %v986, 4
      %v992 = vsel %vm184, %v991, %v974
      %v993 = vrot.slane %v974, 4
      %v994 = vsel %vm184, %v986, %v993
      %v996 = vunpack.c.l.s4 1934713408
      %v997 = vunpack.c.0.s8 %v996
      %v998 = vperm.slane %v992, %v997
      %v1000 = vunpack.c.l.s4 1934713408
      %v1001 = vunpack.c.0.s8 %v1000
      %v1002 = vperm.slane %v994, %v1001
      %v1003 = vrot.slane %v990, 4
      %v1004 = vsel %vm184, %v1003, %v978
      %v1005 = vrot.slane %v978, 4
      %v1006 = vsel %vm184, %v990, %v1005
      %v1008 = vunpack.c.l.s4 1934713408
      %v1009 = vunpack.c.0.s8 %v1008
      %v1010 = vperm.slane %v1004, %v1009
      %v1012 = vunpack.c.l.s4 1934713408
      %v1013 = vunpack.c.0.s8 %v1012
      %v1014 = vperm.slane %v1006, %v1013
      %v1015 = vrot.slane %v998, 4
      %v1016 = vsel %vm184, 0.0, %v1015
      %v1017 = vrot.slane %v1002, 4
      %v1018 = vsel %vm184, 0.0, %v1017
      %v1019 = vrot.slane %v1010, 4
      %v1020 = vsel %vm184, 0.0, %v1019
      %v1021 = vrot.slane %v1014, 4
      %v1022 = vsel %vm184, 0.0, %v1021
      %v1023 = vrot.slane %v946, 4
      %v1024 = vsel %vm184, %v1023, %v934
      %v1025 = vrot.slane %v934, 4
      %v1026 = vsel %vm184, %v946, %v1025
      %v1028 = vunpack.c.l.s4 1983009808
      %v1029 = vunpack.c.0.s8 %v1028
      %v1030 = vperm.slane %v1024, %v1029
      %v1032 = vunpack.c.l.s4 1983009808
      %v1033 = vunpack.c.0.s8 %v1032
      %v1034 = vperm.slane %v1026, %v1033
      %v1035 = vrot.slane %v952, 4
      %v1036 = vsel %vm184, %v1035, %v940
      %v1037 = vrot.slane %v940, 4
      %v1038 = vsel %vm184, %v952, %v1037
      %v1040 = vunpack.c.l.s4 1983009808
      %v1041 = vunpack.c.0.s8 %v1040
      %v1042 = vperm.slane %v1036, %v1041
      %v1044 = vunpack.c.l.s4 1983009808
      %v1045 = vunpack.c.0.s8 %v1044
      %v1046 = vperm.slane %v1038, %v1045
      %v1047 = vrot.slane %v1042, 4
      %v1048 = vsel %vm184, %v1047, %v1030
      %v1049 = vrot.slane %v1030, 4
      %v1050 = vsel %vm184, %v1042, %v1049
      %v1052 = vunpack.c.l.s4 1934713408
      %v1053 = vunpack.c.0.s8 %v1052
      %v1054 = vperm.slane %v1048, %v1053
      %v1056 = vunpack.c.l.s4 1934713408
      %v1057 = vunpack.c.0.s8 %v1056
      %v1058 = vperm.slane %v1050, %v1057
      %v1059 = vrot.slane %v1046, 4
      %v1060 = vsel %vm184, %v1059, %v1034
      %v1061 = vrot.slane %v1034, 4
      %v1062 = vsel %vm184, %v1046, %v1061
      %v1064 = vunpack.c.l.s4 1934713408
      %v1065 = vunpack.c.0.s8 %v1064
      %v1066 = vperm.slane %v1060, %v1065
      %v1068 = vunpack.c.l.s4 1934713408
      %v1069 = vunpack.c.0.s8 %v1068
      %v1070 = vperm.slane %v1062, %v1069
      %v1071 = vrot.slane %v1054, 4
      %v1072 = vsel %vm184, 0.0, %v1071
      %v1073 = vrot.slane %v1058, 4
      %v1074 = vsel %vm184, 0.0, %v1073
      %v1075 = vrot.slane %v1066, 4
      %v1076 = vsel %vm184, 0.0, %v1075
      %v1077 = vrot.slane %v1070, 4
      %v1078 = vsel %vm184, 0.0, %v1077
      %v1079 = vrot.slane %v948, 4
      %v1080 = vsel %vm184, %v1079, %v936
      %v1082 = vunpack.c.l.s4 1983009808
      %v1083 = vunpack.c.0.s8 %v1082
      %v1084 = vperm.slane %v1080, %v1083
      %v1085 = vrot.slane %v954, 4
      %v1086 = vsel %vm184, %v1085, %v942
      %v1088 = vunpack.c.l.s4 1983009808
      %v1089 = vunpack.c.0.s8 %v1088
      %v1090 = vperm.slane %v1086, %v1089
      %v1091 = vrot.slane %v1090, 4
      %v1092 = vsel %vm184, %v1091, %v1084
      %v1094 = vunpack.c.l.s4 1934713408
      %v1095 = vunpack.c.0.s8 %v1094
      %v1096 = vperm.slane %v1092, %v1095
      %1098 = vrot.lane.b32.xlu0 %v1016, 17
      %v1099 = vpop.permute.xlu0 %1098
      %1102 = vrot.lane.b32.xlu0 %v1002, 34
      %v1103 = vpop.permute.xlu0 %1102
      %1106 = vrot.lane.b32.xlu0 %v1018, 51
      %v1107 = vpop.permute.xlu0 %1106
      %1110 = vrot.lane.b32.xlu0 %v1010, 68
      %v1111 = vpop.permute.xlu0 %1110
      %1114 = vrot.lane.b32.xlu0 %v1020, 85
      %v1115 = vpop.permute.xlu0 %1114
      %1118 = vrot.lane.b32.xlu0 %v1014, 102
      %v1119 = vpop.permute.xlu0 %1118
      %1122 = vrot.lane.b32.xlu0 %v1022, 119
      %v1123 = vpop.permute.xlu0 %1122
      %1126 = vrot.lane.b32.xlu0 %v1054, 8
      %v1127 = vpop.permute.xlu0 %1126
      %1130 = vrot.lane.b32.xlu0 %v1072, 25
      %v1131 = vpop.permute.xlu0 %1130
      %1134 = vrot.lane.b32.xlu0 %v1058, 42
      %v1135 = vpop.permute.xlu0 %1134
      %1138 = vrot.lane.b32.xlu0 %v1074, 59
      %v1139 = vpop.permute.xlu0 %1138
      %1142 = vrot.lane.b32.xlu0 %v1066, 76
      %v1143 = vpop.permute.xlu0 %1142
      %1146 = vrot.lane.b32.xlu0 %v1076, 93
      %v1147 = vpop.permute.xlu0 %1146
      %1150 = vrot.lane.b32.xlu0 %v1070, 110
      %v1151 = vpop.permute.xlu0 %1150
      %1154 = vrot.lane.b32.xlu0 %v1078, 127
      %v1155 = vpop.permute.xlu0 %1154
      %1158 = vrot.lane.b32.xlu0 %v1096, 16
      %v1159 = vpop.permute.xlu0 %1158
      %v1161 = vsel %vm378, %v998, %v1099
      %v1162 = vsel %vm380, %v1161, %v1103
      %v1163 = vsel %vm382, %v1162, %v1107
      %v1164 = vsel %vm384, %v1163, %v1111
      %v1165 = vsel %vm386, %v1164, %v1115
      %v1166 = vsel %vm388, %v1165, %v1119
      %v1167 = vsel %vm390, %v1166, %v1123
      %v1168 = vsel %vm392, %v1123, %v1127
      %v1169 = vsel %vm394, %v1168, %v1131
      %v1170 = vsel %vm396, %v1169, %v1135
      %v1171 = vsel %vm398, %v1170, %v1139
      %v1172 = vsel %vm400, %v1171, %v1143
      %v1173 = vsel %vm402, %v1172, %v1147
      %v1174 = vsel %vm404, %v1173, %v1151
      %v1175 = vsel %vm406, %v1174, %v1155
      %v1176 = vsel %vm408, %v1155, %v1159
      %v1180 = vrot.slane %v1167, 4
      %v1181 = vrot.slane %v1175, 4
      %v1182 = vrot.slane %v1176, 4
      %1186 = vst [vmem:[#allocation2 + $0x18] sm:$0xf0] %v1180
      %1187 = vst [vmem:[#allocation2 + $0x20] sm:$0xf0] %v1181
      %1188 = vst.msk [vmem:[#allocation2 + $0x28] sm:$0xf0] %vm683, %v1182
      %v1189 = vld [vmem:[%s1] sm:$0xff]
      %v1190 = vld [vmem:[%s1 + $0x8] sm:$0xff]
      %v1191 = vld [vmem:[%s1 + $0x10] sm:$0xff]
      %v1192 = vld [vmem:[%s1 + $0x18] sm:$0xff]
      %v1193 = vld [vmem:[#allocation2] sm:$0xff]
      %v1194 = vld [vmem:[#allocation2 + $0x8] sm:$0xff]
      %v1195 = vld [vmem:[#allocation2 + $0x10] sm:$0xff]
      %v1196 = vld [vmem:[#allocation2 + $0x18] sm:$0xff]
      %v1197 = vld [vmem:[#allocation2 + $0x20] sm:$0xff]
      %v1198 = vld [vmem:[#allocation2 + $0x28] sm:$0xff]
      %v1199 = vld [vmem:[%s2] sm:$0xff]
      %v1200 = vld [vmem:[%s2 + $0x8] sm:$0xff]
      %v1201 = vld [vmem:[%s2 + $0x10] sm:$0xff]
      %v1202 = vld [vmem:[%s2 + $0x18] sm:$0xff]
      %1204 = vset.pattern.permute.xlu0 0
      %1205 = vperm.xlu0 %1204, %v1199
      %v1206 = vpop.permute.xlu0 %1205
      %1209 = vset.pattern.permute.xlu0 0
      %1210 = vperm.xlu0 %1209, %v1200
      %v1211 = vpop.permute.xlu0 %1210
      %1214 = vset.pattern.permute.xlu0 0
      %1215 = vperm.xlu0 %1214, %v1201
      %v1216 = vpop.permute.xlu0 %1215
      %1219 = vset.pattern.permute.xlu0 0
      %1220 = vperm.xlu0 %1219, %v1202
      %v1221 = vpop.permute.xlu0 %1220
      %v1224 = vsel %vm408, %v1189, 0
      %v1227 = vsel %vm408, %v1190, 0
      %v1230 = vsel %vm408, %v1191, 0
      %v1233 = vsel %vm408, %v1192, 0
      %1235 = vmatpush.msra.mxu0 0.0
      %1236 = vmatpush.msra.mxu0 0.0
      %1237 = vmatpush.msra.mxu0 0.0
      %1238 = vmatpush.msra.mxu0 0.0
      %1239 = vmatpush.msra.mxu0 0.0
      %1240 = vmatpush.msra.mxu0 0.0
      %1241 = vmatpush.msra.mxu0 0.0
      %1242 = vmatpush.msra.mxu0 0.0
      %1243 = vmatpush.msra.mxu0 0.0
      %1244 = vmatpush.msra.mxu0 0.0
      %1245 = vmatpush.msra.mxu0 0.0
      %1246 = vmatpush.msra.mxu0 0.0
      %1247 = vmatpush.msra.mxu0 0.0
      %1248 = vmatpush.msra.mxu0 0.0
      %1249 = vmatpush.msra.mxu0 %v1196
      %1250 = vmatpush.msra.mxu0 %v1193
      %1251 = vmatmul.f32.gmra.mxu0 %v1224
      %v1252 = vpop.f32.mrf.mxu0
      %v1253 = vadd.f32 %v1206, %v1252
      %1254 = vmatmul.f32.gmra.mxu0 %v1227
      %v1255 = vpop.f32.mrf.mxu0
      %v1256 = vadd.f32 %v1211, %v1255
      %1257 = vmatmul.f32.gmra.mxu0 %v1230
      %v1258 = vpop.f32.mrf.mxu0
      %v1259 = vadd.f32 %v1216, %v1258
      %1260 = vmatmul.f32.gmra.mxu0 %v1233
      %v1261 = vpop.f32.mrf.mxu0
      %v1262 = vadd.f32 %v1221, %v1261
      %1263 = vdwg.mxu0
      %1264 = vmatpush.msra.mxu0 0.0
      %1265 = vmatpush.msra.mxu0 0.0
      %1266 = vmatpush.msra.mxu0 0.0
      %1267 = vmatpush.msra.mxu0 0.0
      %1268 = vmatpush.msra.mxu0 0.0
      %1269 = vmatpush.msra.mxu0 0.0
      %1270 = vmatpush.msra.mxu0 0.0
      %1271 = vmatpush.msra.mxu0 0.0
      %1272 = vmatpush.msra.mxu0 0.0
      %1273 = vmatpush.msra.mxu0 0.0
      %1274 = vmatpush.msra.mxu0 0.0
      %1275 = vmatpush.msra.mxu0 0.0
      %1276 = vmatpush.msra.mxu0 0.0
      %1277 = vmatpush.msra.mxu0 0.0
      %1278 = vmatpush.msra.mxu0 %v1197
      %1279 = vmatpush.msra.mxu0 %v1194
      %1280 = vmatmul.f32.gmra.mxu0 %v1224
      %v1281 = vpop.f32.mrf.mxu0
      %v1282 = vadd.f32 %v1206, %v1281
      %1283 = vmatmul.f32.gmra.mxu0 %v1227
      %v1284 = vpop.f32.mrf.mxu0
      %v1285 = vadd.f32 %v1211, %v1284
      %1286 = vmatmul.f32.gmra.mxu0 %v1230
      %v1287 = vpop.f32.mrf.mxu0
      %v1288 = vadd.f32 %v1216, %v1287
      %1289 = vmatmul.f32.gmra.mxu0 %v1233
      %v1290 = vpop.f32.mrf.mxu0
      %v1291 = vadd.f32 %v1221, %v1290
      %1292 = vdwg.mxu0
      %1293 = vmatpush.msra.mxu0 0.0
      %1294 = vmatpush.msra.mxu0 0.0
      %1295 = vmatpush.msra.mxu0 0.0
      %1296 = vmatpush.msra.mxu0 0.0
      %1297 = vmatpush.msra.mxu0 0.0
      %1298 = vmatpush.msra.mxu0 0.0
      %1299 = vmatpush.msra.mxu0 0.0
      %1300 = vmatpush.msra.mxu0 0.0
      %1301 = vmatpush.msra.mxu0 0.0
      %1302 = vmatpush.msra.mxu0 0.0
      %1303 = vmatpush.msra.mxu0 0.0
      %1304 = vmatpush.msra.mxu0 0.0
      %1305 = vmatpush.msra.mxu0 0.0
      %1306 = vmatpush.msra.mxu0 0.0
      %1307 = vmatpush.msra.mxu0 %v1198
      %1308 = vmatpush.msra.mxu0 %v1195
      %1309 = vmatmul.f32.gmra.mxu0 %v1224
      %v1310 = vpop.f32.mrf.mxu0
      %v1311 = vadd.f32 %v1206, %v1310
      %1312 = vmatmul.f32.gmra.mxu0 %v1227
      %v1313 = vpop.f32.mrf.mxu0
      %v1314 = vadd.f32 %v1211, %v1313
      %1315 = vmatmul.f32.gmra.mxu0 %v1230
      %v1316 = vpop.f32.mrf.mxu0
      %v1317 = vadd.f32 %v1216, %v1316
      %1318 = vmatmul.f32.gmra.mxu0 %v1233
      %v1319 = vpop.f32.mrf.mxu0
      %v1320 = vadd.f32 %v1221, %v1319
      %1321 = vdwg.mxu0
      %v1322 = vxor.u32 %v1259, 2147483648
      %v1323 = vxor.u32 %v1288, 2147483648
      %v1324 = vxor.u32 %v1317, 2147483648
      %v1325 = vxor.u32 %v1262, 2147483648
      %v1326 = vxor.u32 %v1291, 2147483648
      %v1327 = vxor.u32 %v1320, 2147483648
      %v1328 = vmul.f32 %v1322, 1.442695
      %v1329 = vpow.pop %v1328
      %v1330 = vmul.f32 %v1323, 1.442695
      %v1331 = vpow.pop %v1330
      %v1332 = vmul.f32 %v1324, 1.442695
      %v1333 = vpow.pop %v1332
      %v1334 = vmul.f32 %v1325, 1.442695
      %v1335 = vpow.pop %v1334
      %v1336 = vmul.f32 %v1326, 1.442695
      %v1337 = vpow.pop %v1336
      %v1338 = vmul.f32 %v1327, 1.442695
      %v1339 = vpow.pop %v1338
      %v1340 = vadd.f32 %v1329, 1.0
      %v1341 = vadd.f32 %v1331, 1.0
      %v1342 = vadd.f32 %v1333, 1.0
      %v1343 = vadd.f32 %v1335, 1.0
      %v1344 = vadd.f32 %v1337, 1.0
      %v1345 = vadd.f32 %v1339, 1.0
      %v1346 = vrcp.pop %v1340
      %v1347 = vmul.f32 %v1340, %v1346
      %v1348 = vsub.f32 1.0, %v1347
      %v1349 = vmul.f32 %v1346, %v1348
      %v1350 = vadd.f32 %v1346, %v1349
      %vm1351 = vweird.f32 %v1340
      %vm1352 = vweird.f32 %v1346
      %vm1353 = vmor %vm1351, %vm1352
      %v1354 = vsel %vm1353, %v1346, %v1350
      %v1355 = vand.u32 2147483647, %v1340
      %vm1356 = vcmp.eq.f32.partialorder %v1355, 8.507059e+37
      %v1357 = vand.u32 %v1340, 2147483648
      %v1358 = vor.u32 1.1754944e-38, %v1357
      %v1359 = vsel %vm1356, %v1358, %v1354
      %v1360 = vmul.f32 1.0, %v1359
      %v1361 = vrcp.pop %v1341
      %v1362 = vmul.f32 %v1341, %v1361
      %v1363 = vsub.f32 1.0, %v1362
      %v1364 = vmul.f32 %v1361, %v1363
      %v1365 = vadd.f32 %v1361, %v1364
      %vm1366 = vweird.f32 %v1341
      %vm1367 = vweird.f32 %v1361
      %vm1368 = vmor %vm1366, %vm1367
      %v1369 = vsel %vm1368, %v1361, %v1365
      %v1370 = vand.u32 2147483647, %v1341
      %vm1371 = vcmp.eq.f32.partialorder %v1370, 8.507059e+37
      %v1372 = vand.u32 %v1341, 2147483648
      %v1373 = vor.u32 1.1754944e-38, %v1372
      %v1374 = vsel %vm1371, %v1373, %v1369
      %v1375 = vmul.f32 1.0, %v1374
      %v1376 = vrcp.pop %v1342
      %v1377 = vmul.f32 %v1342, %v1376
      %v1378 = vsub.f32 1.0, %v1377
      %v1379 = vmul.f32 %v1376, %v1378
      %v1380 = vadd.f32 %v1376, %v1379
      %vm1381 = vweird.f32 %v1342
      %vm1382 = vweird.f32 %v1376
      %vm1383 = vmor %vm1381, %vm1382
      %v1384 = vsel %vm1383, %v1376, %v1380
      %v1385 = vand.u32 2147483647, %v1342
      %vm1386 = vcmp.eq.f32.partialorder %v1385, 8.507059e+37
      %v1387 = vand.u32 %v1342, 2147483648
      %v1388 = vor.u32 1.1754944e-38, %v1387
      %v1389 = vsel %vm1386, %v1388, %v1384
      %v1390 = vmul.f32 1.0, %v1389
      %v1391 = vrcp.pop %v1343
      %v1392 = vmul.f32 %v1343, %v1391
      %v1393 = vsub.f32 1.0, %v1392
      %v1394 = vmul.f32 %v1391, %v1393
      %v1395 = vadd.f32 %v1391, %v1394
      %vm1396 = vweird.f32 %v1343
      %vm1397 = vweird.f32 %v1391
      %vm1398 = vmor %vm1396, %vm1397
      %v1399 = vsel %vm1398, %v1391, %v1395
      %v1400 = vand.u32 2147483647, %v1343
      %vm1401 = vcmp.eq.f32.partialorder %v1400, 8.507059e+37
      %v1402 = vand.u32 %v1343, 2147483648
      %v1403 = vor.u32 1.1754944e-38, %v1402
      %v1404 = vsel %vm1401, %v1403, %v1399
      %v1405 = vmul.f32 1.0, %v1404
      %v1406 = vrcp.pop %v1344
      %v1407 = vmul.f32 %v1344, %v1406
      %v1408 = vsub.f32 1.0, %v1407
      %v1409 = vmul.f32 %v1406, %v1408
      %v1410 = vadd.f32 %v1406, %v1409
      %vm1411 = vweird.f32 %v1344
      %vm1412 = vweird.f32 %v1406
      %vm1413 = vmor %vm1411, %vm1412
      %v1414 = vsel %vm1413, %v1406, %v1410
      %v1415 = vand.u32 2147483647, %v1344
      %vm1416 = vcmp.eq.f32.partialorder %v1415, 8.507059e+37
      %v1417 = vand.u32 %v1344, 2147483648
      %v1418 = vor.u32 1.1754944e-38, %v1417
      %v1419 = vsel %vm1416, %v1418, %v1414
      %v1420 = vmul.f32 1.0, %v1419
      %v1421 = vrcp.pop %v1345
      %v1422 = vmul.f32 %v1345, %v1421
      %v1423 = vsub.f32 1.0, %v1422
      %v1424 = vmul.f32 %v1421, %v1423
      %v1425 = vadd.f32 %v1421, %v1424
      %vm1426 = vweird.f32 %v1345
      %vm1427 = vweird.f32 %v1421
      %vm1428 = vmor %vm1426, %vm1427
      %v1429 = vsel %vm1428, %v1421, %v1425
      %v1430 = vand.u32 2147483647, %v1345
      %vm1431 = vcmp.eq.f32.partialorder %v1430, 8.507059e+37
      %v1432 = vand.u32 %v1345, 2147483648
      %v1433 = vor.u32 1.1754944e-38, %v1432
      %v1434 = vsel %vm1431, %v1433, %v1429
      %v1435 = vmul.f32 1.0, %v1434
      %v1436 = vmul.f32 %v1253, %v1360
      %v1437 = vmul.f32 %v1282, %v1375
      %v1438 = vmul.f32 %v1311, %v1390
      %v1439 = vmul.f32 %v1256, %v1405
      %v1440 = vmul.f32 %v1285, %v1420
      %v1441 = vmul.f32 %v1314, %v1435
      %1442 = vst [vmem:[%s170] sm:$0xff] %v1436
      %1443 = vst [vmem:[%s170 + $0x8] sm:$0xff] %v1437
      %vm1444 = vcmask 269312
      %1445 = vst.msk [vmem:[%s170 + $0x10] sm:$0xff] %vm1444, %v1438
      %1446 = vst [vmem:[%s170 + $0x18] sm:$0xff] %v1439
      %1447 = vst [vmem:[%s170 + $0x20] sm:$0xff] %v1440
      %1448 = vst.msk [vmem:[%s170 + $0x28] sm:$0xff] %vm1444, %v1441
      %p1449 = scmp.lt.s32.totalorder %s14, 1
      %s1450 = scalar_select %p1449, %s14, 1
      %s1451 = smul.addr %s1450, 6
      %s1452 = smul.addr %s1451, 8
      %s1453 = scalar_lea.vmem %s3, %s1452
      // Predicated region
      $region33: #{gate_conv_transpose.1} parent=31 // pred_check
        %p1454 = pneg %p100
      $region34: #{gate_conv_transpose.1} parent=31 // pred_check_branch
        %1456 = sbr.rel (%p1454) target = $region36
      $region35: #{gate_conv_transpose.1} parent=31 // pred_region
        _
      $region36: #{gate_conv_transpose.1} parent=31 // pred_fallthru
        _
    $region32: #{gate_conv_transpose.1} parent=5 // pred_fallthru
      _
    %p1457 = scmp.le.s32.totalorder 2, %s9
    // Predicated region
    $region37: #{gate_conv_transpose.1} parent=5 // pred_check
      %p1458 = pneg %p1457
    $region38: #{gate_conv_transpose.1} parent=5 // pred_check_branch
      %1460 = sbr.rel (%p1458) target = $region40
    $region39: #{gate_conv_transpose.1} parent=5 // pred_region
      %s1461 = ssub.s32 %s9, 2
      // Predicated region
      $region41: #{gate_conv_transpose.1} parent=39 // pred_check
        %p1462 = pneg %p106
      $region42: #{gate_conv_transpose.1} parent=39 // pred_check_branch
        %1464 = sbr.rel (%p1462) target = $region44
      $region43: #{gate_conv_transpose.1} parent=39 // pred_region
        %p1465 = scmp.lt.s32.totalorder %s15, 1
        %s1466 = scalar_select %p1465, %s15, 1
        %s1467 = smul.addr %s1466, 6
        %s1468 = smul.addr %s1467, 8
        %s1469 = scalar_lea.vmem %s3, %s1468
      $region44: #{gate_conv_transpose.1} parent=39 // pred_fallthru
        _
    $region40: #{gate_conv_transpose.1} parent=5 // pred_fallthru
      _
  $region6: #{gate_conv_transpose.1} parent=0 // loop_footer
    %s13 = sadd.s32 1, %s9
  $region7: #{gate_conv_transpose.1} parent=0 // loop_footer_branch
    %8 = sbr.rel target = $region3
  $region8: #{gate_conv_transpose.1} parent=0 // loop_exit
    _

</llo_original>
